<compile_context>
chip_gen: v6e
topology: v6e:2x2x1
jax: 0.10.0
libtpu: 0.0.40
codegen_flags: <defaults>
</compile_context>

<pallas_src>
import functools

import jax
import jax.numpy as jnp
import numpy as np
from jax import lax
from jax.experimental import pallas as pl
from jax.experimental.pallas import tpu as pltpu

_EPS = 1e-7


def _round_up(x, m):
    return (x + m - 1) // m * m


def _maxpool_same_halo(x, k):
    """Stride-1 'same' k x k max pool of a 2D slab x:(Hp, Wp).

    Caller guarantees:
      * x >= 0 everywhere and x == 0 outside the valid (h, w) region, and
      * the trailing halo (Hp - h rows, Wp - w cols) is >= (k-1)//2,
    so zero padding is equivalent to F.max_pool2d's -inf padding and roll
    wrap-around only deposits junk into the halo (never into the valid
    region).  Halo junk is masked / multiplied by zero downstream.
    All shifts go through pltpu.roll (XLU slot); no per-roll VPU masks.
    """
    p = (k - 1) // 2
    hp, wp = x.shape
    # pass along H (sublane axis)
    y = x
    for d in range(1, p + 1):
        y = jnp.maximum(y, pltpu.roll(x, d, axis=0))
        y = jnp.maximum(y, pltpu.roll(x, hp - d, axis=0))
    # pass along W (lane axis)
    z = y
    for d in range(1, p + 1):
        z = jnp.maximum(z, pltpu.roll(y, d, axis=1))
        z = jnp.maximum(z, pltpu.roll(y, wp - d, axis=1))
    return z


def _boundary_loss_kernel(pred_ref, gt_ref, out_ref, *scratch, theta0, theta,
                          num_classes, h_valid, w_valid):
    exp_ref = scratch[0] if scratch else None    # optional softmax-numer cache
    c = num_classes
    _, hp, wp = pred_ref.shape

    row = lax.broadcasted_iota(jnp.int32, (hp, wp), 0)
    col = lax.broadcasted_iota(jnp.int32, (hp, wp), 1)
    valid = jnp.logical_and(row < h_valid, col < w_valid)

    gt = gt_ref[...].astype(jnp.int32)                       # (Hp, Wp)

    # Softmax statistics over the channel axis with only (Hp, Wp)-sized live
    # temporaries (no (C, Hp, Wp) materialization unless the cache is enabled).
    def _max_body(ch, acc):
        return jnp.maximum(acc, pred_ref[ch].astype(jnp.float32))
    m = lax.fori_loop(0, c, _max_body,
                      jnp.full((hp, wp), -1e30, dtype=jnp.float32))

    if exp_ref is not None:
        # 128 MiB parts: stash exp(logit - m) so the channel loop does not
        # reload the logit or recompute the exp.
        def _den_body(ch, acc):
            e = jnp.exp(pred_ref[ch].astype(jnp.float32) - m)
            exp_ref[ch] = e
            return acc + e
    else:
        def _den_body(ch, acc):
            return acc + jnp.exp(pred_ref[ch].astype(jnp.float32) - m)
    denom = lax.fori_loop(0, c, _den_body, jnp.zeros((hp, wp), jnp.float32))
    inv_denom = 1.0 / denom            # hoisted out of the channel loop (exact)

    # Per-channel loop: live set stays at O(H*W) instead of O(C*H*W).
    def _chan_body(ch, acc):
        if exp_ref is not None:
            sm = exp_ref[ch] * inv_denom                     # softmax slice
        else:
            sm = jnp.exp(pred_ref[ch].astype(jnp.float32) - m) * inv_denom
        oh = (gt == ch).astype(jnp.float32)                  # one-hot slice

        # Mask pool inputs to the valid region -> guaranteed zero halo.
        one_m_sm = jnp.where(valid, 1.0 - sm, 0.0)
        one_m_oh = jnp.where(valid, 1.0 - oh, 0.0)

        pred_b = _maxpool_same_halo(one_m_sm, theta0) - one_m_sm
        gt_b = _maxpool_same_halo(one_m_oh, theta0) - one_m_oh
        pred_b = jnp.where(valid, pred_b, 0.0)
        gt_b = jnp.where(valid, gt_b, 0.0)

        pred_b_ext = _maxpool_same_halo(pred_b, theta)
        gt_b_ext = _maxpool_same_halo(gt_b, theta)

        # Straight elementwise-mul + jnp.sum (no reshapes/slices -> no hidden
        # VMEM copies).  Halo junk in *_ext multiplies masked (zero) slabs.
        s_pb_gbe = jnp.sum(pred_b * gt_b_ext, keepdims=True)  # (1, 1)
        s_pb = jnp.sum(pred_b, keepdims=True)
        s_pbe_gb = jnp.sum(pred_b_ext * gt_b, keepdims=True)
        s_gb = jnp.sum(gt_b, keepdims=True)

        P = s_pb_gbe / (s_pb + _EPS)
        R = s_pbe_gb / (s_gb + _EPS)
        bf1 = 2.0 * P * R / (P + R + _EPS)
        return acc + (1.0 - bf1)

    loss_sum = lax.fori_loop(0, c, _chan_body, jnp.zeros((1, 1), jnp.float32))
    out_ref[...] = loss_sum * (1.0 / c)        # per-sample mean over channels


def boundary_loss(pred, gt, theta0=3, theta=5):
    """pred: (N, C, H, W) float logits; gt: (N, H, W) integer labels in [0, C)."""
    if theta0 % 2 != 1 or theta % 2 != 1:
        raise ValueError("theta0 and theta must be odd (as in the PyTorch module)")
    n, c, h, w = pred.shape
    halo = max((theta0 - 1) // 2, (theta - 1) // 2)

    # Lane/sublane-dense layout with a guaranteed zero halo of >= halo rows /
    # cols: W -> multiple of 128 (lane axis), H -> multiple of 8 (sublanes).
    # Padded pixels are masked in-kernel (contribute exactly 0) and the halo
    # makes pltpu.roll wrap-around harmless, so no per-roll masks are needed.
    hp = _round_up(max(h + halo, 8), 8)
    wp = _round_up(max(w + halo, 128), 128)
    if (hp, wp) != (h, w):
        pred = jnp.pad(pred, ((0, 0), (0, 0), (0, hp - h), (0, wp - w)))
        gt = jnp.pad(gt, ((0, 0), (0, hp - h), (0, wp - w)))

    # --- VMEM budgeting, clamped to the actual chip capacity (v7x = 64 MiB).
    try:
        vmem_cap = int(getattr(pltpu.get_tpu_info(), "vmem_capacity_bytes",
                               64 * 1024 * 1024))
    except Exception:                      # conservative fallback (v7x-sized)
        vmem_cap = 64 * 1024 * 1024
    vmem_budget = max(vmem_cap - 8 * 1024 * 1024, 16 * 1024 * 1024)

    pred_blk = c * hp * wp * pred.dtype.itemsize
    gt_blk = hp * wp * gt.dtype.itemsize
    tmp_bytes = 16 * hp * wp * 4           # in-kernel f32 temporaries headroom
    exp_cache_bytes = c * hp * wp * 4

    need = 2 * (pred_blk + gt_blk) + tmp_bytes   # default: double-buffered
    pred_pipeline_mode = None
    if int(need * 1.25) > vmem_budget:
        # 64 MiB parts: single-buffer the large pred block (kernel is
        # VPU-bound; the exposed per-sample DMA is a small fraction of compute).
        # TODO(synk): H-tiled grid with a ((theta0-1)//2+(theta-1)//2)-row halo
        #             and per-(sample, tile, channel) partial sums for shapes
        #             where even a single-buffered block does not fit VMEM.
        pred_pipeline_mode = pl.Buffered(1)
        need = pred_blk + 2 * gt_blk + tmp_bytes

    cache_exp = (pred_pipeline_mode is None and
                 int((need + exp_cache_bytes) * 1.25) <= vmem_budget)
    scratch_shapes = []
    if cache_exp:
        scratch_shapes.append(pltpu.VMEM((c, hp, wp), jnp.float32))
        need += exp_cache_bytes

    vmem_limit = int(min(max(int(need * 1.25), 32 * 1024 * 1024), vmem_budget))

    kernel = functools.partial(
        _boundary_loss_kernel, theta0=theta0, theta=theta,
        num_classes=c, h_valid=h, w_valid=w)

    if pred_pipeline_mode is not None:
        pred_spec = pl.BlockSpec((None, c, hp, wp), lambda i: (i, 0, 0, 0),
                                 pipeline_mode=pred_pipeline_mode)
    else:
        pred_spec = pl.BlockSpec((None, c, hp, wp), lambda i: (i, 0, 0, 0))

    per_sample = pl.pallas_call(
        kernel,
        out_shape=jax.ShapeDtypeStruct((n, 1, 1), jnp.float32),
        grid=(n,),
        in_specs=[
            pred_spec,
            pl.BlockSpec((None, hp, wp), lambda i: (i, 0, 0)),
        ],
        out_specs=pl.BlockSpec((None, 1, 1), lambda i: (i, 0, 0)),
        scratch_shapes=scratch_shapes,
        compiler_params=pltpu.CompilerParams(
            dimension_semantics=("parallel",),   # independent per-sample outputs
            vmem_limit_bytes=vmem_limit),
    )(pred, gt)                                  # native dtypes, no wrapper casts
    return jnp.mean(per_sample)


def _boundary_loss_ref(pred, gt, theta0=3, theta=5):
    """Pure-JAX reference mirroring the PyTorch module (correctness check)."""
    n, c, h, w = pred.shape
    sm = jax.nn.softmax(pred.astype(jnp.float32), axis=1)
    oh = jax.nn.one_hot(gt, c, axis=1, dtype=jnp.float32)

    def mp(x, k):
        p = (k - 1) // 2
        xpad = jnp.pad(x, ((0, 0), (0, 0), (p, p), (p, p)),
                       constant_values=-jnp.inf)
        out = jnp.full_like(x, -jnp.inf)
        for dh in range(k):
            for dw in range(k):
                out = jnp.maximum(out, xpad[:, :, dh:dh + h, dw:dw + w])
        return out

    gt_b = mp(1.0 - oh, theta0) - (1.0 - oh)
    pred_b = mp(1.0 - sm, theta0) - (1.0 - sm)
    gt_b_ext = mp(gt_b, theta)
    pred_b_ext = mp(pred_b, theta)
    gt_b = gt_b.reshape(n, c, -1)
    pred_b = pred_b.reshape(n, c, -1)
    gt_b_ext = gt_b_ext.reshape(n, c, -1)
    pred_b_ext = pred_b_ext.reshape(n, c, -1)
    P = jnp.sum(pred_b * gt_b_ext, axis=2) / (jnp.sum(pred_b, axis=2) + _EPS)
    R = jnp.sum(pred_b_ext * gt_b, axis=2) / (jnp.sum(gt_b, axis=2) + _EPS)
    bf1 = 2.0 * P * R / (P + R + _EPS)
    return jnp.mean(1.0 - bf1)


if __name__ == "__main__":
    # Small shapes consistent with the module: pred (N,C,H,W), gt (N,H,W)
    N, C, H, W = 2, 4, 16, 16
    key = jax.random.PRNGKey(0)
    k_pred, k_gt = jax.random.split(key)
    pred = jax.random.normal(k_pred, (N, C, H, W), dtype=jnp.float32)
    gt = jax.random.randint(k_gt, (N, H, W), minval=0, maxval=C, dtype=jnp.int32)

    loss = boundary_loss(pred, gt, theta0=3, theta=5)
    loss = jax.block_until_ready(loss)

    ref = jax.block_until_ready(_boundary_loss_ref(pred, gt, theta0=3, theta=5))
    if not np.allclose(np.asarray(loss), np.asarray(ref), rtol=1e-4, atol=1e-5):
        raise AssertionError(f"mismatch: pallas={float(loss)} ref={float(ref)}")

    print("KERNEL_OK")
</pallas_src>

<mosaic_0001>
module attributes {stable_mosaic.version = 11 : i64} {
  func.func @_boundary_loss_kernel(%arg0: i32, %arg1: memref<1x4x24x128xf32, #tpu.memory_space<vmem>>, %arg2: memref<1x24x128xi32, #tpu.memory_space<vmem>>, %arg3: memref<1x1x1xf32, #tpu.memory_space<vmem>>, %arg4: memref<4x24x128xf32, #tpu.memory_space<vmem>>) attributes {dimension_semantics = [#tpu.dimension_semantics<parallel>], iteration_bounds = array<i64: 2>, scalar_prefetch = 0 : i64, scratch_operands = 1 : i64, tpu.core_type = #tpu.core_type<tc>, window_params = [{transform_indices = @transform_0, window_bounds = array<i64: 1, 4, 24, 128>}, {transform_indices = @transform_1, window_bounds = array<i64: 1, 24, 128>}, {transform_indices = @transform_2, window_bounds = array<i64: 1, 1, 1>}]} {
    %0 = tpu.iota {dimensions = array<i32: 0>} : vector<24x128xi32>
    %1 = tpu.iota {dimensions = array<i32: 1>} : vector<24x128xi32>
    %c16_i32 = arith.constant 16 : i32
    %2 = vector.broadcast %c16_i32 : i32 to vector<24x128xi32>
    %3 = arith.cmpi slt, %0, %2 : vector<24x128xi32>
    %c16_i32_0 = arith.constant 16 : i32
    %4 = vector.broadcast %c16_i32_0 : i32 to vector<24x128xi32>
    %5 = arith.cmpi slt, %1, %4 : vector<24x128xi32>
    %6 = arith.andi %3, %5 : vector<24x128xi1>
    %c0 = arith.constant 0 : index
    %c0_1 = arith.constant 0 : index
    %c0_2 = arith.constant 0 : index
    %7 = vector.load %arg2[%c0, %c0_1, %c0_2] : memref<1x24x128xi32, #tpu.memory_space<vmem>>, vector<1x24x128xi32>
    %8 = vector.shape_cast %7 : vector<1x24x128xi32> to vector<24x128xi32>
    %cst = arith.constant -1.000000e+30 : f32
    %9 = vector.broadcast %cst : f32 to vector<24x128xf32>
    %c0_i32 = arith.constant 0 : i32
    %c4_i32 = arith.constant 4 : i32
    %10 = arith.addi %c0_i32, %c4_i32 : i32
    %c1_i32 = arith.constant 1 : i32
    %11 = scf.for %arg5 = %c0_i32 to %10 step %c1_i32 iter_args(%arg6 = %9) -> (vector<24x128xf32>)  : i32 {
      %c0_19 = arith.constant 0 : index
      %25 = arith.index_cast %arg5 : i32 to index
      %c0_20 = arith.constant 0 : index
      %c0_21 = arith.constant 0 : index
      %26 = vector.load %arg1[%c0_19, %25, %c0_20, %c0_21] : memref<1x4x24x128xf32, #tpu.memory_space<vmem>>, vector<1x1x24x128xf32>
      %27 = vector.shape_cast %26 : vector<1x1x24x128xf32> to vector<24x128xf32>
      %28 = arith.maximumf %arg6, %27 : vector<24x128xf32>
      scf.yield %28 : vector<24x128xf32>
    }
    %c4_i32_3 = arith.constant 4 : i32
    %cst_4 = arith.constant 0.000000e+00 : f32
    %12 = vector.broadcast %cst_4 : f32 to vector<24x128xf32>
    %c0_i32_5 = arith.constant 0 : i32
    %c4_i32_6 = arith.constant 4 : i32
    %13 = arith.addi %c0_i32_5, %c4_i32_6 : i32
    %c1_i32_7 = arith.constant 1 : i32
    %14 = scf.for %arg5 = %c0_i32_5 to %13 step %c1_i32_7 iter_args(%arg6 = %12) -> (vector<24x128xf32>)  : i32 {
      %c0_19 = arith.constant 0 : index
      %25 = arith.index_cast %arg5 : i32 to index
      %c0_20 = arith.constant 0 : index
      %c0_21 = arith.constant 0 : index
      %26 = vector.load %arg1[%c0_19, %25, %c0_20, %c0_21] : memref<1x4x24x128xf32, #tpu.memory_space<vmem>>, vector<1x1x24x128xf32>
      %27 = vector.shape_cast %26 : vector<1x1x24x128xf32> to vector<24x128xf32>
      %28 = arith.subf %27, %11 : vector<24x128xf32>
      %29 = math.exp %28 : vector<24x128xf32>
      %30 = arith.index_cast %arg5 : i32 to index
      %c0_22 = arith.constant 0 : index
      %c0_23 = arith.constant 0 : index
      %31 = vector.load %arg4[%30, %c0_22, %c0_23] : memref<4x24x128xf32, #tpu.memory_space<vmem>>, vector<1x24x128xf32>
      %32 = vector.shape_cast %31 : vector<1x24x128xf32> to vector<24x128xf32>
      %33 = vector.shape_cast %29 : vector<24x128xf32> to vector<1x24x128xf32>
      tpu.vector_store %arg4[%30, %c0_22, %c0_23], %33 {strides = array<i32>} : memref<4x24x128xf32, #tpu.memory_space<vmem>>, vector<1x24x128xf32>,
      %34 = arith.addf %arg6, %29 : vector<24x128xf32>
      scf.yield %34 : vector<24x128xf32>
    }
    %c4_i32_8 = arith.constant 4 : i32
    %cst_9 = arith.constant 1.000000e+00 : f32
    %15 = vector.broadcast %cst_9 : f32 to vector<24x128xf32>
    %16 = arith.divf %15, %14 : vector<24x128xf32>
    %cst_10 = arith.constant 0.000000e+00 : f32
    %17 = vector.broadcast %cst_10 : f32 to vector<1x1xf32>
    %c0_i32_11 = arith.constant 0 : i32
    %c4_i32_12 = arith.constant 4 : i32
    %18 = arith.addi %c0_i32_11, %c4_i32_12 : i32
    %c1_i32_13 = arith.constant 1 : i32
    %19 = scf.for %arg5 = %c0_i32_11 to %18 step %c1_i32_13 iter_args(%arg6 = %17) -> (vector<1x1xf32>)  : i32 {
      %25 = arith.index_cast %arg5 : i32 to index
      %c0_19 = arith.constant 0 : index
      %c0_20 = arith.constant 0 : index
      %26 = vector.load %arg4[%25, %c0_19, %c0_20] : memref<4x24x128xf32, #tpu.memory_space<vmem>>, vector<1x24x128xf32>
      %27 = vector.shape_cast %26 : vector<1x24x128xf32> to vector<24x128xf32>
      %28 = arith.mulf %27, %16 : vector<24x128xf32>
      %29 = vector.broadcast %arg5 : i32 to vector<24x128xi32>
      %30 = arith.cmpi eq, %8, %29 : vector<24x128xi32>
      %31 = arith.extui %30 : vector<24x128xi1> to vector<24x128xi32>
      %32 = arith.sitofp %31 : vector<24x128xi32> to vector<24x128xf32>
      %cst_21 = arith.constant 1.000000e+00 : f32
      %33 = vector.broadcast %cst_21 : f32 to vector<24x128xf32>
      %34 = arith.subf %33, %28 : vector<24x128xf32>
      %cst_22 = arith.constant 0.000000e+00 : f32
      %35 = vector.broadcast %cst_22 : f32 to vector<24x128xf32>
      %36 = arith.select %6, %34, %35 : vector<24x128xi1>, vector<24x128xf32>
      %cst_23 = arith.constant 1.000000e+00 : f32
      %37 = vector.broadcast %cst_23 : f32 to vector<24x128xf32>
      %38 = arith.subf %37, %32 : vector<24x128xf32>
      %cst_24 = arith.constant 0.000000e+00 : f32
      %39 = vector.broadcast %cst_24 : f32 to vector<24x128xf32>
      %40 = arith.select %6, %38, %39 : vector<24x128xi1>, vector<24x128xf32>
      %c1_i32_25 = arith.constant 1 : i32
      %41 = tpu.dynamic_rotate %36 by %c1_i32_25 dim 0 : vector<24x128xf32>, i32 -> vector<24x128xf32>
      %42 = arith.maximumf %36, %41 : vector<24x128xf32>
      %c23_i32 = arith.constant 23 : i32
      %43 = tpu.dynamic_rotate %36 by %c23_i32 dim 0 : vector<24x128xf32>, i32 -> vector<24x128xf32>
      %44 = arith.maximumf %42, %43 : vector<24x128xf32>
      %c1_i32_26 = arith.constant 1 : i32
      %45 = tpu.dynamic_rotate %44 by %c1_i32_26 dim 1 : vector<24x128xf32>, i32 -> vector<24x128xf32>
      %46 = arith.maximumf %44, %45 : vector<24x128xf32>
      %c127_i32 = arith.constant 127 : i32
      %47 = tpu.dynamic_rotate %44 by %c127_i32 dim 1 : vector<24x128xf32>, i32 -> vector<24x128xf32>
      %48 = arith.maximumf %46, %47 : vector<24x128xf32>
      %49 = arith.subf %48, %36 : vector<24x128xf32>
      %c1_i32_27 = arith.constant 1 : i32
      %50 = tpu.dynamic_rotate %40 by %c1_i32_27 dim 0 : vector<24x128xf32>, i32 -> vector<24x128xf32>
      %51 = arith.maximumf %40, %50 : vector<24x128xf32>
      %c23_i32_28 = arith.constant 23 : i32
      %52 = tpu.dynamic_rotate %40 by %c23_i32_28 dim 0 : vector<24x128xf32>, i32 -> vector<24x128xf32>
      %53 = arith.maximumf %51, %52 : vector<24x128xf32>
      %c1_i32_29 = arith.constant 1 : i32
      %54 = tpu.dynamic_rotate %53 by %c1_i32_29 dim 1 : vector<24x128xf32>, i32 -> vector<24x128xf32>
      %55 = arith.maximumf %53, %54 : vector<24x128xf32>
      %c127_i32_30 = arith.constant 127 : i32
      %56 = tpu.dynamic_rotate %53 by %c127_i32_30 dim 1 : vector<24x128xf32>, i32 -> vector<24x128xf32>
      %57 = arith.maximumf %55, %56 : vector<24x128xf32>
      %58 = arith.subf %57, %40 : vector<24x128xf32>
      %cst_31 = arith.constant 0.000000e+00 : f32
      %59 = vector.broadcast %cst_31 : f32 to vector<24x128xf32>
      %60 = arith.select %6, %49, %59 : vector<24x128xi1>, vector<24x128xf32>
      %cst_32 = arith.constant 0.000000e+00 : f32
      %61 = vector.broadcast %cst_32 : f32 to vector<24x128xf32>
      %62 = arith.select %6, %58, %61 : vector<24x128xi1>, vector<24x128xf32>
      %c1_i32_33 = arith.constant 1 : i32
      %63 = tpu.dynamic_rotate %60 by %c1_i32_33 dim 0 : vector<24x128xf32>, i32 -> vector<24x128xf32>
      %64 = arith.maximumf %60, %63 : vector<24x128xf32>
      %c23_i32_34 = arith.constant 23 : i32
      %65 = tpu.dynamic_rotate %60 by %c23_i32_34 dim 0 : vector<24x128xf32>, i32 -> vector<24x128xf32>
      %66 = arith.maximumf %64, %65 : vector<24x128xf32>
      %c2_i32 = arith.constant 2 : i32
      %67 = tpu.dynamic_rotate %60 by %c2_i32 dim 0 : vector<24x128xf32>, i32 -> vector<24x128xf32>
      %68 = arith.maximumf %66, %67 : vector<24x128xf32>
      %c22_i32 = arith.constant 22 : i32
      %69 = tpu.dynamic_rotate %60 by %c22_i32 dim 0 : vector<24x128xf32>, i32 -> vector<24x128xf32>
      %70 = arith.maximumf %68, %69 : vector<24x128xf32>
      %c1_i32_35 = arith.constant 1 : i32
      %71 = tpu.dynamic_rotate %70 by %c1_i32_35 dim 1 : vector<24x128xf32>, i32 -> vector<24x128xf32>
      %72 = arith.maximumf %70, %71 : vector<24x128xf32>
      %c127_i32_36 = arith.constant 127 : i32
      %73 = tpu.dynamic_rotate %70 by %c127_i32_36 dim 1 : vector<24x128xf32>, i32 -> vector<24x128xf32>
      %74 = arith.maximumf %72, %73 : vector<24x128xf32>
      %c2_i32_37 = arith.constant 2 : i32
      %75 = tpu.dynamic_rotate %70 by %c2_i32_37 dim 1 : vector<24x128xf32>, i32 -> vector<24x128xf32>
      %76 = arith.maximumf %74, %75 : vector<24x128xf32>
      %c126_i32 = arith.constant 126 : i32
      %77 = tpu.dynamic_rotate %70 by %c126_i32 dim 1 : vector<24x128xf32>, i32 -> vector<24x128xf32>
      %78 = arith.maximumf %76, %77 : vector<24x128xf32>
      %c1_i32_38 = arith.constant 1 : i32
      %79 = tpu.dynamic_rotate %62 by %c1_i32_38 dim 0 : vector<24x128xf32>, i32 -> vector<24x128xf32>
      %80 = arith.maximumf %62, %79 : vector<24x128xf32>
      %c23_i32_39 = arith.constant 23 : i32
      %81 = tpu.dynamic_rotate %62 by %c23_i32_39 dim 0 : vector<24x128xf32>, i32 -> vector<24x128xf32>
      %82 = arith.maximumf %80, %81 : vector<24x128xf32>
      %c2_i32_40 = arith.constant 2 : i32
      %83 = tpu.dynamic_rotate %62 by %c2_i32_40 dim 0 : vector<24x128xf32>, i32 -> vector<24x128xf32>
      %84 = arith.maximumf %82, %83 : vector<24x128xf32>
      %c22_i32_41 = arith.constant 22 : i32
      %85 = tpu.dynamic_rotate %62 by %c22_i32_41 dim 0 : vector<24x128xf32>, i32 -> vector<24x128xf32>
      %86 = arith.maximumf %84, %85 : vector<24x128xf32>
      %c1_i32_42 = arith.constant 1 : i32
      %87 = tpu.dynamic_rotate %86 by %c1_i32_42 dim 1 : vector<24x128xf32>, i32 -> vector<24x128xf32>
      %88 = arith.maximumf %86, %87 : vector<24x128xf32>
      %c127_i32_43 = arith.constant 127 : i32
      %89 = tpu.dynamic_rotate %86 by %c127_i32_43 dim 1 : vector<24x128xf32>, i32 -> vector<24x128xf32>
      %90 = arith.maximumf %88, %89 : vector<24x128xf32>
      %c2_i32_44 = arith.constant 2 : i32
      %91 = tpu.dynamic_rotate %86 by %c2_i32_44 dim 1 : vector<24x128xf32>, i32 -> vector<24x128xf32>
      %92 = arith.maximumf %90, %91 : vector<24x128xf32>
      %c126_i32_45 = arith.constant 126 : i32
      %93 = tpu.dynamic_rotate %86 by %c126_i32_45 dim 1 : vector<24x128xf32>, i32 -> vector<24x128xf32>
      %94 = arith.maximumf %92, %93 : vector<24x128xf32>
      %95 = arith.mulf %60, %94 : vector<24x128xf32>
      %96 = vector.shape_cast %95 : vector<24x128xf32> to vector<1x24x128xf32>
      %cst_46 = arith.constant dense<0.000000e+00> : vector<1xf32>
      %97 = vector.multi_reduction <add>, %96, %cst_46 [1, 2] : vector<1x24x128xf32> to vector<1xf32>
      %98 = vector.shape_cast %97 : vector<1xf32> to vector<1x1x1xf32>
      %99 = vector.extract %98[0, 0, 0] : f32 from vector<1x1x1xf32>
      %100 = vector.broadcast %99 : f32 to vector<1x1xf32>
      %101 = vector.shape_cast %60 : vector<24x128xf32> to vector<1x24x128xf32>
      %cst_47 = arith.constant dense<0.000000e+00> : vector<1xf32>
      %102 = vector.multi_reduction <add>, %101, %cst_47 [1, 2] : vector<1x24x128xf32> to vector<1xf32>
      %103 = vector.shape_cast %102 : vector<1xf32> to vector<1x1x1xf32>
      %104 = vector.extract %103[0, 0, 0] : f32 from vector<1x1x1xf32>
      %105 = vector.broadcast %104 : f32 to vector<1x1xf32>
      %106 = arith.mulf %78, %62 : vector<24x128xf32>
      %107 = vector.shape_cast %106 : vector<24x128xf32> to vector<1x24x128xf32>
      %cst_48 = arith.constant dense<0.000000e+00> : vector<1xf32>
      %108 = vector.multi_reduction <add>, %107, %cst_48 [1, 2] : vector<1x24x128xf32> to vector<1xf32>
      %109 = vector.shape_cast %108 : vector<1xf32> to vector<1x1x1xf32>
      %110 = vector.extract %109[0, 0, 0] : f32 from vector<1x1x1xf32>
      %111 = vector.broadcast %110 : f32 to vector<1x1xf32>
      %112 = vector.shape_cast %62 : vector<24x128xf32> to vector<1x24x128xf32>
      %cst_49 = arith.constant dense<0.000000e+00> : vector<1xf32>
      %113 = vector.multi_reduction <add>, %112, %cst_49 [1, 2] : vector<1x24x128xf32> to vector<1xf32>
      %114 = vector.shape_cast %113 : vector<1xf32> to vector<1x1x1xf32>
      %115 = vector.extract %114[0, 0, 0] : f32 from vector<1x1x1xf32>
      %116 = vector.broadcast %115 : f32 to vector<1x1xf32>
      %cst_50 = arith.constant 1.000000e-07 : f32
      %117 = vector.broadcast %cst_50 : f32 to vector<1x1xf32>
      %118 = arith.addf %105, %117 : vector<1x1xf32>
      %119 = arith.divf %100, %118 : vector<1x1xf32>
      %cst_51 = arith.constant 1.000000e-07 : f32
      %120 = vector.broadcast %cst_51 : f32 to vector<1x1xf32>
      %121 = arith.addf %116, %120 : vector<1x1xf32>
      %122 = arith.divf %111, %121 : vector<1x1xf32>
      %cst_52 = arith.constant 2.000000e+00 : f32
      %123 = vector.broadcast %cst_52 : f32 to vector<1x1xf32>
      %124 = arith.mulf %123, %119 : vector<1x1xf32>
      %125 = arith.mulf %124, %122 : vector<1x1xf32>
      %126 = arith.addf %119, %122 : vector<1x1xf32>
      %cst_53 = arith.constant 1.000000e-07 : f32
      %127 = vector.broadcast %cst_53 : f32 to vector<1x1xf32>
      %128 = arith.addf %126, %127 : vector<1x1xf32>
      %129 = arith.divf %125, %128 : vector<1x1xf32>
      %cst_54 = arith.constant 1.000000e+00 : f32
      %130 = vector.broadcast %cst_54 : f32 to vector<1x1xf32>
      %131 = arith.subf %130, %129 : vector<1x1xf32>
      %132 = arith.addf %arg6, %131 : vector<1x1xf32>
      scf.yield %132 : vector<1x1xf32>
    }
    %c4_i32_14 = arith.constant 4 : i32
    %cst_15 = arith.constant 2.500000e-01 : f32
    %20 = vector.broadcast %cst_15 : f32 to vector<1x1xf32>
    %21 = arith.mulf %19, %20 : vector<1x1xf32>
    %c0_16 = arith.constant 0 : index
    %c0_17 = arith.constant 0 : index
    %c0_18 = arith.constant 0 : index
    %22 = vector.load %arg3[%c0_16, %c0_17, %c0_18] : memref<1x1x1xf32, #tpu.memory_space<vmem>>, vector<1x1x1xf32>
    %23 = vector.shape_cast %22 : vector<1x1x1xf32> to vector<1x1xf32>
    %24 = vector.shape_cast %21 : vector<1x1xf32> to vector<1x1x1xf32>
    tpu.vector_store %arg3[%c0_16, %c0_17, %c0_18], %24 {strides = array<i32>} : memref<1x1x1xf32, #tpu.memory_space<vmem>>, vector<1x1x1xf32>,
    return
  }
  func.func @transform_0(%arg0: i32) -> (i32, i32, i32, i32) {
    %c0_i32 = arith.constant 0 : i32
    %c0_i32_0 = arith.constant 0 : i32
    %c0_i32_1 = arith.constant 0 : i32
    %c0_i32_2 = arith.constant 0 : i32
    return %arg0, %c0_i32, %c0_i32_0, %c0_i32_1 : i32, i32, i32, i32
  }
  func.func @transform_1(%arg0: i32) -> (i32, i32, i32) {
    %c0_i32 = arith.constant 0 : i32
    %c0_i32_0 = arith.constant 0 : i32
    %c0_i32_1 = arith.constant 0 : i32
    return %arg0, %c0_i32, %c0_i32_0 : i32, i32, i32
  }
  func.func @transform_2(%arg0: i32) -> (i32, i32, i32) {
    %c0_i32 = arith.constant 0 : i32
    %c0_i32_0 = arith.constant 0 : i32
    %c0_i32_1 = arith.constant 0 : i32
    return %arg0, %c0_i32, %c0_i32_0 : i32, i32, i32
  }
}

</mosaic_0001>

<llo_original>
// kernel: tpu_custom_call.1
$region0: #{tpu_custom_call.1}
  #allocation0 [shape = 'u32[]', space=smem, size = 0x4, offset = 0x4, fixed_abs, tag = 'smem constant byte address 0x4 - core index']
  #allocation1 [shape = 'u32[144,128]{1,0:T(1,128)}', space=vmem, size = 0x12000, scoped, tag = 'internal scratch']
  #allocation2 [shape = 'f32[4,24,128]{2,1,0:T(8,128)}', space=vmem, size = 0xc000, scoped, tag = 'scratch operand']
  %s0 = inlined_call_operand.hbm [shape: f32[2,4,24,128], index: 0, kind: input, shape index: {}]
  %s1 = inlined_call_operand.hbm [shape: s32[2,24,128], index: 1, kind: input, shape index: {}]
  %s2 = inlined_call_operand.vmem [shape: f32[2,1,1], index: 2, kind: output, shape index: {}]
  %s3 = sld [smem:[#allocation0]]
  $region70: #{tpu_custom_call.1} parent=0
    _
  %s5 = ssub.s32 1, %s3
  %s6 = scalar_select 0, %s5, %s3
  $region1: #{tpu_custom_call.1} parent=0
    #allocation3 [shape = 'u8[98304]{0}', space=vmem, size = 0x18000, scoped, tag = 'input window, operand 0']
    #allocation4 [shape = 's32[2]{0}', space=sflag, size = 0x8, scoped, tag = 'scoped memory for tpu_custom_call.1']
    #allocation5 [shape = 'u8[24576]{0}', space=vmem, size = 0x6000, scoped, tag = 'input window, operand 1']
    #allocation6 [shape = 's32[2]{0}', space=sflag, size = 0x8, scoped, tag = 'scoped memory for tpu_custom_call.1']
    %7 = vsyncpa [#allocation4], 0
    %s8 = scalar_lea.sflag [#allocation4], 1
    %9 = vsyncpa %s8, 0
    %10 = vsyncpa [#allocation6], 0
    %s11 = scalar_lea.sflag [#allocation6], 1
    %12 = vsyncpa %s11, 0
    loop: start=0, step=1, limit=4
    $region2: #{tpu_custom_call.1} parent=1 // loop_pre_header
      _
    $region3: #{tpu_custom_call.1} parent=1 // loop_header
      %s14 = sphi 0, %s18
      %p15 = scmp.ge.s32.totalorder %s14, 4
      %s24 = sphi 0, %s26
      %s27 = sphi 0, %s24
      %s28 = sphi 0, %s27
      %s44 = sphi 0, %s28
      %s50 = sphi 0, %s52
      %s53 = sphi 0, %s50
      %s54 = sphi 0, %s53
      %s70 = sphi 0, %s54
      %s76 = sphi 0, %s78
      %s79 = sphi 0, %s76
      %s80 = sphi 0, %s79
      %s96 = sphi 0, %s80
    $region4: #{tpu_custom_call.1} parent=1 // loop_header_branch
      %17 = sbr.rel (%p15) target = $region8
    $region5: #{tpu_custom_call.1} parent=1 // loop_body
      %s19 = ssub.s32 %s14, 1
      %s20 = ssub.s32 %s14, 2
      %s21 = sadd.s32 %s14, 1
      %s22 = ssub.s32 %s14, %s21
      %p23 = scmp.eq.s32.totalorder %s22, 0
      %s25 = sadd.s32 %s24, 1
      %s26 = scalar_select %p23, %s24, %s25
      %p29 = pneg %p23
      %p30 = scmp.eq.s32.totalorder %s14, 1
      %p31 = por %p29, %p30
      %p32 = scmp.ne.s32.totalorder %s24, %s27
      %p33 = scmp.eq.s32.totalorder %s14, 0
      %p34 = por %p32, %p33
      %p35 = scmp.ne.s32.totalorder %s24, %s27
      %p36 = scmp.eq.s32.totalorder %s19, 1
      %p37 = por %p35, %p36
      %p38 = scmp.ne.s32.totalorder %s27, %s28
      %p39 = scmp.eq.s32.totalorder %s19, 0
      %p40 = por %p38, %p39
      %p41 = scmp.ne.s32.totalorder %s27, %s28
      %p42 = scmp.eq.s32.totalorder %s20, 1
      %p43 = por %p41, %p42
      %p45 = scmp.ne.s32.totalorder %s28, %s44
      %p46 = scmp.eq.s32.totalorder %s20, 0
      %p47 = por %p45, %p46
      %s48 = ssub.s32 %s14, %s21
      %p49 = scmp.eq.s32.totalorder %s48, 0
      %s51 = sadd.s32 %s50, 1
      %s52 = scalar_select %p49, %s50, %s51
      %p55 = pneg %p49
      %p56 = scmp.eq.s32.totalorder %s14, 1
      %p57 = por %p55, %p56
      %p58 = scmp.ne.s32.totalorder %s50, %s53
      %p59 = scmp.eq.s32.totalorder %s14, 0
      %p60 = por %p58, %p59
      %p61 = scmp.ne.s32.totalorder %s50, %s53
      %p62 = scmp.eq.s32.totalorder %s19, 1
      %p63 = por %p61, %p62
      %p64 = scmp.ne.s32.totalorder %s53, %s54
      %p65 = scmp.eq.s32.totalorder %s19, 0
      %p66 = por %p64, %p65
      %p67 = scmp.ne.s32.totalorder %s53, %s54
      %p68 = scmp.eq.s32.totalorder %s20, 1
      %p69 = por %p67, %p68
      %p71 = scmp.ne.s32.totalorder %s54, %s70
      %p72 = scmp.eq.s32.totalorder %s20, 0
      %p73 = por %p71, %p72
      %s74 = ssub.s32 %s14, %s21
      %p75 = scmp.eq.s32.totalorder %s74, 0
      %s77 = sadd.s32 %s76, 1
      %s78 = scalar_select %p75, %s76, %s77
      %p81 = pneg %p75
      %p82 = scmp.eq.s32.totalorder %s14, 1
      %p83 = por %p81, %p82
      %p84 = scmp.ne.s32.totalorder %s76, %s79
      %p85 = scmp.eq.s32.totalorder %s14, 0
      %p86 = por %p84, %p85
      %p87 = scmp.ne.s32.totalorder %s76, %s79
      %p88 = scmp.eq.s32.totalorder %s19, 1
      %p89 = por %p87, %p88
      %p90 = scmp.ne.s32.totalorder %s79, %s80
      %p91 = scmp.eq.s32.totalorder %s19, 0
      %p92 = por %p90, %p91
      %p93 = scmp.ne.s32.totalorder %s79, %s80
      %p94 = scmp.eq.s32.totalorder %s20, 1
      %p95 = por %p93, %p94
      %p97 = scmp.ne.s32.totalorder %s80, %s96
      %p98 = scmp.eq.s32.totalorder %s20, 0
      %p99 = por %p97, %p98
      %p100 = scmp.le.s32.totalorder 1, %s14
      %p101 = scmp.lt.s32.totalorder %s14, 3
      %p102 = pnand %p100, %p101
      %p103 = pneg %p102
      // Predicated region
      $region9: #{tpu_custom_call.1} parent=5 // pred_check
        _
      $region10: #{tpu_custom_call.1} parent=5 // pred_check_branch
        %105 = sbr.rel (%p102) target = $region12
      $region11: #{tpu_custom_call.1} parent=5 // pred_region
        %s106 = ssub.s32 %s14, 1
      $region12: #{tpu_custom_call.1} parent=5 // pred_fallthru
        _
      %p107 = scmp.lt.s32.totalorder %s14, 2
      // Predicated region
      $region13: #{tpu_custom_call.1} parent=5 // pred_check
        %p108 = pneg %p107
      $region14: #{tpu_custom_call.1} parent=5 // pred_check_branch
        %110 = sbr.rel (%p108) target = $region16
      $region15: #{tpu_custom_call.1} parent=5 // pred_region
        // Predicated region
        $region17: #{tpu_custom_call.1} parent=15 // pred_check
          %p111 = pneg %p34
        $region18: #{tpu_custom_call.1} parent=15 // pred_check_branch
          %113 = sbr.rel (%p111) target = $region20
        $region19: #{tpu_custom_call.1} parent=15 // pred_region
          %s114 = sand.u32 %s24, 1
          %s115 = scalar_lea.sflag [#allocation4], %s114
          %s116 = sand.u32 %s24, 1
          %s117 = smul.addr %s116, 96
          %s118 = scalar_lea.vmem [#allocation3], %s117
          %s120 = ssub.s32 1536, 1536
          %121 = vsyncadd %s115, %s120
          %s122 = smul.addr %s14, 12
          %s123 = smul.addr %s122, 128
          %s124 = scalar_lea.hbm %s0, %s123
          %s125 = sshll.u32 %s118, 4
          %s126 = int_to_ptr.vmem [resolvable:$true] %s125
          %131 = dma.hbm_to_vmem [thread:$0]  %s124, 1536, %s126, %s115, 128, 128, 8
        $region20: #{tpu_custom_call.1} parent=15 // pred_fallthru
          _
        // Predicated region
        $region21: #{tpu_custom_call.1} parent=15 // pred_check
          %p132 = pneg %p60
        $region22: #{tpu_custom_call.1} parent=15 // pred_check_branch
          %134 = sbr.rel (%p132) target = $region24
        $region23: #{tpu_custom_call.1} parent=15 // pred_region
          %s135 = sand.u32 %s50, 1
          %s136 = scalar_lea.sflag [#allocation6], %s135
          %s137 = sand.u32 %s50, 1
          %s138 = smul.addr %s137, 24
          %s139 = scalar_lea.vmem [#allocation5], %s138
          %s141 = ssub.s32 384, 384
          %142 = vsyncadd %s136, %s141
          %s143 = smul.addr %s14, 3
          %s144 = smul.addr %s143, 128
          %s145 = scalar_lea.hbm %s1, %s144
          %s146 = sshll.u32 %s139, 4
          %s147 = int_to_ptr.vmem [resolvable:$true] %s146
          %152 = dma.hbm_to_vmem [thread:$0]  %s145, 384, %s147, %s136, 128, 128, 8
        $region24: #{tpu_custom_call.1} parent=15 // pred_fallthru
          _
      $region16: #{tpu_custom_call.1} parent=5 // pred_fallthru
        _
      %p153 = scmp.le.s32.totalorder 1, %s14
      %p154 = scmp.lt.s32.totalorder %s14, 3
      %p155 = pnand %p153, %p154
      %p156 = pneg %p155
      // Predicated region
      $region25: #{tpu_custom_call.1} parent=5 // pred_check
        _
      $region26: #{tpu_custom_call.1} parent=5 // pred_check_branch
        %158 = sbr.rel (%p155) target = $region28
      $region27: #{tpu_custom_call.1} parent=5 // pred_region
        %s159 = ssub.s32 %s14, 1
        %s160 = sand.u32 %s27, 1
        %s161 = scalar_lea.sflag [#allocation4], %s160
        %s162 = sand.u32 %s27, 1
        %s163 = smul.addr %s162, 96
        %s164 = scalar_lea.vmem [#allocation3], %s163
        // Predicated region
        $region29: #{tpu_custom_call.1} parent=27 // pred_check
          %p165 = pneg %p40
        $region30: #{tpu_custom_call.1} parent=27 // pred_check_branch
          %167 = sbr.rel (%p165) target = $region32
        $region31: #{tpu_custom_call.1} parent=27 // pred_region
          %168 = dma.done %s161, 1536
        $region32: #{tpu_custom_call.1} parent=27 // pred_fallthru
          _
        %s169 = sand.u32 %s53, 1
        %s170 = scalar_lea.sflag [#allocation6], %s169
        %s171 = sand.u32 %s53, 1
        %s172 = smul.addr %s171, 24
        %s173 = scalar_lea.vmem [#allocation5], %s172
        // Predicated region
        $region33: #{tpu_custom_call.1} parent=27 // pred_check
          %p174 = pneg %p66
        $region34: #{tpu_custom_call.1} parent=27 // pred_check_branch
          %176 = sbr.rel (%p174) target = $region36
        $region35: #{tpu_custom_call.1} parent=27 // pred_region
          %177 = dma.done %s170, 384
        $region36: #{tpu_custom_call.1} parent=27 // pred_fallthru
          _
        %s178 = sand.u32 %s27, 1
        %s179 = scalar_lea.sflag [#allocation4], %s178
        %s180 = sand.u32 %s27, 1
        %s181 = smul.addr %s180, 96
        %s182 = scalar_lea.vmem [#allocation3], %s181
        %p183 = pneg %p40
        %p184 = pneg %p37
        %s185 = sand.u32 %s53, 1
        %s186 = scalar_lea.sflag [#allocation6], %s185
        %s187 = sand.u32 %s53, 1
        %s188 = smul.addr %s187, 24
        %s189 = scalar_lea.vmem [#allocation5], %s188
        %p190 = pneg %p66
        %p191 = pneg %p63
        %p192 = pneg %p92
        %p193 = pneg %p89
        %p194 = scmp.lt.s32.totalorder %s19, 1
        %s195 = scalar_select %p194, %s19, 1
        %s196 = scalar_lea.vmem %s2, %s195
        %p197 = scmp.lt.s32.totalorder %s19, 1
        %s198 = scalar_select %p197, %s19, 1
        %s199 = scalar_lea.vmem %s2, %s198
        %v200 = vlaneseq
        %v201 = vshrl.u32 %v200, 7
        %v202 = vadd.s32 %v201, 8
        %v203 = vadd.s32 %v201, 16
        %v204 = vlaneseq
        %v205 = vand.u32 %v204, 127
        %vm206 = vcmp.lt.s32.totalorder %v201, 16
        %vm207 = vcmp.lt.s32.totalorder %v202, 16
        %vm208 = vcmp.lt.s32.totalorder %v203, 16
        %vm209 = vcmp.lt.s32.totalorder %v205, 16
        %vm210 = vmand %vm206, %vm209
        %vm211 = vmand %vm207, %vm209
        %vm212 = vmand %vm208, %vm209
        %v213 = vld [vmem:[%s173] sm:$0xff]
        %v214 = vld [vmem:[%s173 + $0x8] sm:$0xff]
        %v215 = vld [vmem:[%s173 + $0x10] sm:$0xff]
        loop: start=0, step=1, limit=4
        $region37: #{tpu_custom_call.1} parent=27 // loop_pre_header
          _
        $region38: #{tpu_custom_call.1} parent=27 // loop_header
          %s217 = sphi 0, %s221
          %p218 = scmp.ge.s32.totalorder %s217, 4
          %v222 = vphi -1e+30, %v230
          %v223 = vphi -1e+30, %v231
          %v224 = vphi -1e+30, %v232
        $region39: #{tpu_custom_call.1} parent=27 // loop_header_branch
          %220 = sbr.rel (%p218) target = $region43
        $region40: #{tpu_custom_call.1} parent=27 // loop_body
          %s225 = smul.u32 %s217, 24
          %s226 = scalar_lea.vmem %s164, %s225 [#allocation3]
          %v227 = vld [vmem:[%s226] sm:$0xff]
          %v228 = vld [vmem:[%s226 + $0x8] sm:$0xff]
          %v229 = vld [vmem:[%s226 + $0x10] sm:$0xff]
          %v230 = vmax.f32 %v222, %v227
          %v231 = vmax.f32 %v223, %v228
          %v232 = vmax.f32 %v224, %v229
        $region41: #{tpu_custom_call.1} parent=27 // loop_footer
          %s221 = sadd.s32 1, %s217
        $region42: #{tpu_custom_call.1} parent=27 // loop_footer_branch
          %216 = sbr.rel target = $region38
        $region43: #{tpu_custom_call.1} parent=27 // loop_exit
          _
        loop: start=0, step=1, limit=4
        $region44: #{tpu_custom_call.1} parent=27 // loop_pre_header
          _
        $region45: #{tpu_custom_call.1} parent=27 // loop_header
          %s234 = sphi 0, %s238
          %p235 = scmp.ge.s32.totalorder %s234, 4
          %v239 = vphi 0.0, %v260
          %v240 = vphi 0.0, %v261
          %v241 = vphi 0.0, %v262
        $region46: #{tpu_custom_call.1} parent=27 // loop_header_branch
          %237 = sbr.rel (%p235) target = $region50
        $region47: #{tpu_custom_call.1} parent=27 // loop_body
          %s242 = smul.u32 %s234, 24
          %s243 = scalar_lea.vmem %s164, %s242 [#allocation3]
          %v244 = vld [vmem:[%s243] sm:$0xff]
          %v245 = vld [vmem:[%s243 + $0x8] sm:$0xff]
          %v246 = vld [vmem:[%s243 + $0x10] sm:$0xff]
          %v247 = vsub.f32 %v244, %v222
          %v248 = vsub.f32 %v245, %v223
          %v249 = vsub.f32 %v246, %v224
          %v250 = vmul.f32 %v247, 1.442695
          %v251 = vpow.pop %v250
          %v252 = vmul.f32 %v248, 1.442695
          %v253 = vpow.pop %v252
          %v254 = vmul.f32 %v249, 1.442695
          %v255 = vpow.pop %v254
          %s256 = scalar_lea.vmem [#allocation2], %s242
          %257 = vst [vmem:[%s256] sm:$0xff] %v251
          %258 = vst [vmem:[%s256 + $0x8] sm:$0xff] %v253
          %259 = vst [vmem:[%s256 + $0x10] sm:$0xff] %v255
          %v260 = vadd.f32 %v239, %v251
          %v261 = vadd.f32 %v240, %v253
          %v262 = vadd.f32 %v241, %v255
        $region48: #{tpu_custom_call.1} parent=27 // loop_footer
          %s238 = sadd.s32 1, %s234
        $region49: #{tpu_custom_call.1} parent=27 // loop_footer_branch
          %233 = sbr.rel target = $region45
        $region50: #{tpu_custom_call.1} parent=27 // loop_exit
          _
        %v263 = vrcp.pop %v239
        %v264 = vmul.f32 1.0, %v263
        %v265 = vrcp.pop %v240
        %v266 = vmul.f32 1.0, %v265
        %v267 = vrcp.pop %v241
        %v268 = vmul.f32 1.0, %v267
        loop: start=0, step=1, limit=4
        $region51: #{tpu_custom_call.1} parent=27 // loop_pre_header
          _
        $region52: #{tpu_custom_call.1} parent=27 // loop_header
          %s270 = sphi 0, %s274
          %p271 = scmp.ge.s32.totalorder %s270, 4
          %v275 = vphi 0.0, %v605
        $region53: #{tpu_custom_call.1} parent=27 // loop_header_branch
          %273 = sbr.rel (%p271) target = $region57
        $region54: #{tpu_custom_call.1} parent=27 // loop_body
          %s276 = smul.u32 %s270, 24
          %s277 = scalar_lea.vmem [#allocation2], %s276
          %v278 = vld [vmem:[%s277] sm:$0xff]
          %v279 = vld [vmem:[%s277 + $0x8] sm:$0xff]
          %v280 = vld [vmem:[%s277 + $0x10] sm:$0xff]
          %v281 = vmul.f32 %v278, %v264
          %v282 = vmul.f32 %v279, %v266
          %v283 = vmul.f32 %v280, %v268
          %v284 = vstv %s270
          %vm285 = vcmp.eq.s32.totalorder %v213, %v284
          %vm286 = vcmp.eq.s32.totalorder %v214, %v284
          %vm287 = vcmp.eq.s32.totalorder %v215, %v284
          %v288 = vsel %vm285, 1, 0
          %v289 = vsel %vm286, 1, 0
          %v290 = vsel %vm287, 1, 0
          %v291 = vcvt.s32.f32 %v288
          %v292 = vcvt.s32.f32 %v289
          %v293 = vcvt.s32.f32 %v290
          %v294 = vsub.f32 1.0, %v281
          %v295 = vsub.f32 1.0, %v282
          %v296 = vsub.f32 1.0, %v283
          %v297 = vsel %vm210, %v294, 0.0
          %v298 = vsel %vm211, %v295, 0.0
          %v299 = vsel %vm212, %v296, 0.0
          %v300 = vsub.f32 1.0, %v291
          %v301 = vsub.f32 1.0, %v292
          %v302 = vsub.f32 1.0, %v293
          %v303 = vsel %vm210, %v300, 0.0
          %v304 = vsel %vm211, %v301, 0.0
          %v305 = vsel %vm212, %v302, 0.0
          %v306 = vrot.slane %v297, 7
          %v307 = vrot.slane %v298, 7
          %v308 = vrot.slane %v299, 7
          %vm309 = vcmp.lt.s32.totalorder %v201, 1
          %v310 = vsel %vm309, %v307, %v308
          %v311 = vsel %vm309, %v306, %v307
          %v312 = vsel %vm309, %v308, %v306
          %v313 = vmax.f32 %v297, %v312
          %v314 = vmax.f32 %v298, %v311
          %v315 = vmax.f32 %v299, %v310
          %v316 = vrot.slane %v297, 1
          %v317 = vrot.slane %v298, 1
          %v318 = vrot.slane %v299, 1
          %vm319 = vcmp.lt.s32.totalorder %v201, 7
          %v320 = vsel %vm319, %v317, %v318
          %v321 = vsel %vm319, %v316, %v317
          %v322 = vsel %vm319, %v318, %v316
          %v323 = vmax.f32 %v313, %v321
          %v324 = vmax.f32 %v314, %v320
          %v325 = vmax.f32 %v315, %v322
          %326 = vrot.lane.b32.xlu0 %v323, 1
          %v327 = vpop.permute.xlu0 %326
          %328 = vrot.lane.b32.xlu0 %v324, 1
          %v329 = vpop.permute.xlu0 %328
          %330 = vrot.lane.b32.xlu0 %v325, 1
          %v331 = vpop.permute.xlu0 %330
          %v332 = vmax.f32 %v323, %v327
          %v333 = vmax.f32 %v324, %v329
          %v334 = vmax.f32 %v325, %v331
          %335 = vrot.lane.b32.xlu0 %v323, 127
          %v336 = vpop.permute.xlu0 %335
          %337 = vrot.lane.b32.xlu0 %v324, 127
          %v338 = vpop.permute.xlu0 %337
          %339 = vrot.lane.b32.xlu0 %v325, 127
          %v340 = vpop.permute.xlu0 %339
          %v341 = vmax.f32 %v332, %v336
          %v342 = vmax.f32 %v333, %v338
          %v343 = vmax.f32 %v334, %v340
          %v344 = vsub.f32 %v341, %v297
          %v345 = vsub.f32 %v342, %v298
          %v346 = vsub.f32 %v343, %v299
          %v347 = vrot.slane %v303, 7
          %v348 = vrot.slane %v304, 7
          %v349 = vrot.slane %v305, 7
          %v350 = vsel %vm309, %v348, %v349
          %v351 = vsel %vm309, %v347, %v348
          %v352 = vsel %vm309, %v349, %v347
          %v353 = vmax.f32 %v303, %v352
          %v354 = vmax.f32 %v304, %v351
          %v355 = vmax.f32 %v305, %v350
          %v356 = vrot.slane %v303, 1
          %v357 = vrot.slane %v304, 1
          %v358 = vrot.slane %v305, 1
          %v359 = vsel %vm319, %v357, %v358
          %v360 = vsel %vm319, %v356, %v357
          %v361 = vsel %vm319, %v358, %v356
          %v362 = vmax.f32 %v353, %v360
          %v363 = vmax.f32 %v354, %v359
          %v364 = vmax.f32 %v355, %v361
          %365 = vrot.lane.b32.xlu0 %v362, 1
          %v366 = vpop.permute.xlu0 %365
          %367 = vrot.lane.b32.xlu0 %v363, 1
          %v368 = vpop.permute.xlu0 %367
          %369 = vrot.lane.b32.xlu0 %v364, 1
          %v370 = vpop.permute.xlu0 %369
          %v371 = vmax.f32 %v362, %v366
          %v372 = vmax.f32 %v363, %v368
          %v373 = vmax.f32 %v364, %v370
          %374 = vrot.lane.b32.xlu0 %v362, 127
          %v375 = vpop.permute.xlu0 %374
          %376 = vrot.lane.b32.xlu0 %v363, 127
          %v377 = vpop.permute.xlu0 %376
          %378 = vrot.lane.b32.xlu0 %v364, 127
          %v379 = vpop.permute.xlu0 %378
          %v380 = vmax.f32 %v371, %v375
          %v381 = vmax.f32 %v372, %v377
          %v382 = vmax.f32 %v373, %v379
          %v383 = vsub.f32 %v380, %v303
          %v384 = vsub.f32 %v381, %v304
          %v385 = vsub.f32 %v382, %v305
          %v386 = vsel %vm210, %v344, 0.0
          %v387 = vsel %vm211, %v345, 0.0
          %v388 = vsel %vm212, %v346, 0.0
          %v389 = vsel %vm210, %v383, 0.0
          %v390 = vsel %vm211, %v384, 0.0
          %v391 = vsel %vm212, %v385, 0.0
          %v392 = vrot.slane %v386, 7
          %v393 = vrot.slane %v387, 7
          %v394 = vrot.slane %v388, 7
          %v395 = vsel %vm309, %v393, %v394
          %v396 = vsel %vm309, %v392, %v393
          %v397 = vsel %vm309, %v394, %v392
          %v398 = vmax.f32 %v386, %v397
          %v399 = vmax.f32 %v387, %v396
          %v400 = vmax.f32 %v388, %v395
          %v401 = vrot.slane %v386, 1
          %v402 = vrot.slane %v387, 1
          %v403 = vrot.slane %v388, 1
          %v404 = vsel %vm319, %v402, %v403
          %v405 = vsel %vm319, %v401, %v402
          %v406 = vsel %vm319, %v403, %v401
          %v407 = vmax.f32 %v398, %v405
          %v408 = vmax.f32 %v399, %v404
          %v409 = vmax.f32 %v400, %v406
          %v410 = vrot.slane %v386, 6
          %v411 = vrot.slane %v387, 6
          %v412 = vrot.slane %v388, 6
          %vm413 = vcmp.lt.s32.totalorder %v201, 2
          %v414 = vsel %vm413, %v411, %v412
          %v415 = vsel %vm413, %v410, %v411
          %v416 = vsel %vm413, %v412, %v410
          %v417 = vmax.f32 %v407, %v416
          %v418 = vmax.f32 %v408, %v415
          %v419 = vmax.f32 %v409, %v414
          %v420 = vrot.slane %v386, 2
          %v421 = vrot.slane %v387, 2
          %v422 = vrot.slane %v388, 2
          %vm423 = vcmp.lt.s32.totalorder %v201, 6
          %v424 = vsel %vm423, %v421, %v422
          %v425 = vsel %vm423, %v420, %v421
          %v426 = vsel %vm423, %v422, %v420
          %v427 = vmax.f32 %v417, %v425
          %v428 = vmax.f32 %v418, %v424
          %v429 = vmax.f32 %v419, %v426
          %430 = vrot.lane.b32.xlu0 %v427, 1
          %v431 = vpop.permute.xlu0 %430
          %432 = vrot.lane.b32.xlu0 %v428, 1
          %v433 = vpop.permute.xlu0 %432
          %434 = vrot.lane.b32.xlu0 %v429, 1
          %v435 = vpop.permute.xlu0 %434
          %v436 = vmax.f32 %v427, %v431
          %v437 = vmax.f32 %v428, %v433
          %v438 = vmax.f32 %v429, %v435
          %439 = vrot.lane.b32.xlu0 %v427, 127
          %v440 = vpop.permute.xlu0 %439
          %441 = vrot.lane.b32.xlu0 %v428, 127
          %v442 = vpop.permute.xlu0 %441
          %443 = vrot.lane.b32.xlu0 %v429, 127
          %v444 = vpop.permute.xlu0 %443
          %v445 = vmax.f32 %v436, %v440
          %v446 = vmax.f32 %v437, %v442
          %v447 = vmax.f32 %v438, %v444
          %448 = vrot.lane.b32.xlu0 %v427, 2
          %v449 = vpop.permute.xlu0 %448
          %450 = vrot.lane.b32.xlu0 %v428, 2
          %v451 = vpop.permute.xlu0 %450
          %452 = vrot.lane.b32.xlu0 %v429, 2
          %v453 = vpop.permute.xlu0 %452
          %v454 = vmax.f32 %v445, %v449
          %v455 = vmax.f32 %v446, %v451
          %v456 = vmax.f32 %v447, %v453
          %457 = vrot.lane.b32.xlu0 %v427, 126
          %v458 = vpop.permute.xlu0 %457
          %459 = vrot.lane.b32.xlu0 %v428, 126
          %v460 = vpop.permute.xlu0 %459
          %461 = vrot.lane.b32.xlu0 %v429, 126
          %v462 = vpop.permute.xlu0 %461
          %v463 = vmax.f32 %v454, %v458
          %v464 = vmax.f32 %v455, %v460
          %v465 = vmax.f32 %v456, %v462
          %v466 = vrot.slane %v389, 7
          %v467 = vrot.slane %v390, 7
          %v468 = vrot.slane %v391, 7
          %v469 = vsel %vm309, %v467, %v468
          %v470 = vsel %vm309, %v466, %v467
          %v471 = vsel %vm309, %v468, %v466
          %v472 = vmax.f32 %v389, %v471
          %v473 = vmax.f32 %v390, %v470
          %v474 = vmax.f32 %v391, %v469
          %v475 = vrot.slane %v389, 1
          %v476 = vrot.slane %v390, 1
          %v477 = vrot.slane %v391, 1
          %v478 = vsel %vm319, %v476, %v477
          %v479 = vsel %vm319, %v475, %v476
          %v480 = vsel %vm319, %v477, %v475
          %v481 = vmax.f32 %v472, %v479
          %v482 = vmax.f32 %v473, %v478
          %v483 = vmax.f32 %v474, %v480
          %v484 = vrot.slane %v389, 6
          %v485 = vrot.slane %v390, 6
          %v486 = vrot.slane %v391, 6
          %v487 = vsel %vm413, %v485, %v486
          %v488 = vsel %vm413, %v484, %v485
          %v489 = vsel %vm413, %v486, %v484
          %v490 = vmax.f32 %v481, %v489
          %v491 = vmax.f32 %v482, %v488
          %v492 = vmax.f32 %v483, %v487
          %v493 = vrot.slane %v389, 2
          %v494 = vrot.slane %v390, 2
          %v495 = vrot.slane %v391, 2
          %v496 = vsel %vm423, %v494, %v495
          %v497 = vsel %vm423, %v493, %v494
          %v498 = vsel %vm423, %v495, %v493
          %v499 = vmax.f32 %v490, %v497
          %v500 = vmax.f32 %v491, %v496
          %v501 = vmax.f32 %v492, %v498
          %502 = vrot.lane.b32.xlu0 %v499, 1
          %v503 = vpop.permute.xlu0 %502
          %504 = vrot.lane.b32.xlu0 %v500, 1
          %v505 = vpop.permute.xlu0 %504
          %506 = vrot.lane.b32.xlu0 %v501, 1
          %v507 = vpop.permute.xlu0 %506
          %v508 = vmax.f32 %v499, %v503
          %v509 = vmax.f32 %v500, %v505
          %v510 = vmax.f32 %v501, %v507
          %511 = vrot.lane.b32.xlu0 %v499, 127
          %v512 = vpop.permute.xlu0 %511
          %513 = vrot.lane.b32.xlu0 %v500, 127
          %v514 = vpop.permute.xlu0 %513
          %515 = vrot.lane.b32.xlu0 %v501, 127
          %v516 = vpop.permute.xlu0 %515
          %v517 = vmax.f32 %v508, %v512
          %v518 = vmax.f32 %v509, %v514
          %v519 = vmax.f32 %v510, %v516
          %520 = vrot.lane.b32.xlu0 %v499, 2
          %v521 = vpop.permute.xlu0 %520
          %522 = vrot.lane.b32.xlu0 %v500, 2
          %v523 = vpop.permute.xlu0 %522
          %524 = vrot.lane.b32.xlu0 %v501, 2
          %v525 = vpop.permute.xlu0 %524
          %v526 = vmax.f32 %v517, %v521
          %v527 = vmax.f32 %v518, %v523
          %v528 = vmax.f32 %v519, %v525
          %529 = vrot.lane.b32.xlu0 %v499, 126
          %v530 = vpop.permute.xlu0 %529
          %531 = vrot.lane.b32.xlu0 %v500, 126
          %v532 = vpop.permute.xlu0 %531
          %533 = vrot.lane.b32.xlu0 %v501, 126
          %v534 = vpop.permute.xlu0 %533
          %v535 = vmax.f32 %v526, %v530
          %v536 = vmax.f32 %v527, %v532
          %v537 = vmax.f32 %v528, %v534
          %v538 = vmul.f32 %v386, %v535
          %v539 = vmul.f32 %v387, %v536
          %v540 = vmul.f32 %v388, %v537
          %v541 = vadd.f32 %v538, %v539
          %v542 = vadd.f32 %v541, %v540
          %543 = vadd.xlane.f32.xlu0 %v542
          %v544 = vpop.xlane.xlu0 %543
          %v545 = vrot.slane %v544, 4
          %v546 = vadd.f32 %v544, %v545
          %v547 = vrot.slane %v546, 2
          %v548 = vadd.f32 %v546, %v547
          %v549 = vrot.slane %v548, 1
          %v550 = vadd.f32 %v548, %v549
          %s551 = vtos %v550
          %v552 = vstv %s551
          %v553 = vadd.f32 %v386, %v387
          %v554 = vadd.f32 %v553, %v388
          %555 = vadd.xlane.f32.xlu0 %v554
          %v556 = vpop.xlane.xlu0 %555
          %v557 = vrot.slane %v556, 4
          %v558 = vadd.f32 %v556, %v557
          %v559 = vrot.slane %v558, 2
          %v560 = vadd.f32 %v558, %v559
          %v561 = vrot.slane %v560, 1
          %v562 = vadd.f32 %v560, %v561
          %s563 = vtos %v562
          %v564 = vstv %s563
          %v565 = vmul.f32 %v463, %v389
          %v566 = vmul.f32 %v464, %v390
          %v567 = vmul.f32 %v465, %v391
          %v568 = vadd.f32 %v565, %v566
          %v569 = vadd.f32 %v568, %v567
          %570 = vadd.xlane.f32.xlu0 %v569
          %v571 = vpop.xlane.xlu0 %570
          %v572 = vrot.slane %v571, 4
          %v573 = vadd.f32 %v571, %v572
          %v574 = vrot.slane %v573, 2
          %v575 = vadd.f32 %v573, %v574
          %v576 = vrot.slane %v575, 1
          %v577 = vadd.f32 %v575, %v576
          %s578 = vtos %v577
          %v579 = vstv %s578
          %v580 = vadd.f32 %v389, %v390
          %v581 = vadd.f32 %v580, %v391
          %582 = vadd.xlane.f32.xlu0 %v581
          %v583 = vpop.xlane.xlu0 %582
          %v584 = vrot.slane %v583, 4
          %v585 = vadd.f32 %v583, %v584
          %v586 = vrot.slane %v585, 2
          %v587 = vadd.f32 %v585, %v586
          %v588 = vrot.slane %v587, 1
          %v589 = vadd.f32 %v587, %v588
          %s590 = vtos %v589
          %v591 = vstv %s590
          %v592 = vadd.f32 %v564, 1e-07
          %v593 = vrcp.pop %v592
          %v594 = vmul.f32 %v552, %v593
          %v595 = vadd.f32 %v591, 1e-07
          %v596 = vrcp.pop %v595
          %v597 = vmul.f32 %v579, %v596
          %v598 = vmul.f32 %v594, 2.0
          %v599 = vmul.f32 %v598, %v597
          %v600 = vadd.f32 %v594, %v597
          %v601 = vadd.f32 %v600, 1e-07
          %v602 = vrcp.pop %v601
          %v603 = vmul.f32 %v599, %v602
          %v604 = vsub.f32 1.0, %v603
          %v605 = vadd.f32 %v275, %v604
        $region55: #{tpu_custom_call.1} parent=27 // loop_footer
          %s274 = sadd.s32 1, %s270
        $region56: #{tpu_custom_call.1} parent=27 // loop_footer_branch
          %269 = sbr.rel target = $region52
        $region57: #{tpu_custom_call.1} parent=27 // loop_exit
          _
        %v606 = vmul.f32 %v275, 0.25
        %vm607 = vcmask 0
        %608 = vst.msk [vmem:[%s199] sm:$0x1] %vm607, %v606
        %p609 = scmp.lt.s32.totalorder %s19, 1
        %s610 = scalar_select %p609, %s19, 1
        %s611 = scalar_lea.vmem %s2, %s610
        // Predicated region
        $region58: #{tpu_custom_call.1} parent=27 // pred_check
          %p612 = pneg %p89
        $region59: #{tpu_custom_call.1} parent=27 // pred_check_branch
          %614 = sbr.rel (%p612) target = $region61
        $region60: #{tpu_custom_call.1} parent=27 // pred_region
          _
        $region61: #{tpu_custom_call.1} parent=27 // pred_fallthru
          _
      $region28: #{tpu_custom_call.1} parent=5 // pred_fallthru
        _
      %p615 = scmp.le.s32.totalorder 2, %s14
      // Predicated region
      $region62: #{tpu_custom_call.1} parent=5 // pred_check
        %p616 = pneg %p615
      $region63: #{tpu_custom_call.1} parent=5 // pred_check_branch
        %618 = sbr.rel (%p616) target = $region65
      $region64: #{tpu_custom_call.1} parent=5 // pred_region
        %s619 = ssub.s32 %s14, 2
        // Predicated region
        $region66: #{tpu_custom_call.1} parent=64 // pred_check
          %p620 = pneg %p95
        $region67: #{tpu_custom_call.1} parent=64 // pred_check_branch
          %622 = sbr.rel (%p620) target = $region69
        $region68: #{tpu_custom_call.1} parent=64 // pred_region
          %p623 = scmp.lt.s32.totalorder %s20, 1
          %s624 = scalar_select %p623, %s20, 1
          %s625 = scalar_lea.vmem %s2, %s624
        $region69: #{tpu_custom_call.1} parent=64 // pred_fallthru
          _
      $region65: #{tpu_custom_call.1} parent=5 // pred_fallthru
        _
    $region6: #{tpu_custom_call.1} parent=1 // loop_footer
      %s18 = sadd.s32 1, %s14
    $region7: #{tpu_custom_call.1} parent=1 // loop_footer_branch
      %13 = sbr.rel target = $region3
    $region8: #{tpu_custom_call.1} parent=1 // loop_exit
      _
    %626 = vsyncpa [#allocation4], 1
    %s627 = scalar_lea.sflag [#allocation4], 1
    %628 = vsyncpa %s627, 1
    %629 = vsyncpa [#allocation6], 1
    %s630 = scalar_lea.sflag [#allocation6], 1
    %631 = vsyncpa %s630, 1

</llo_original>
